<compile_context>
chip_gen: v7x
topology: tpu7x:2x2x1
jax: 0.10.0
libtpu: 0.0.40
codegen_flags: <defaults>
</compile_context>

<pallas_src>
import functools
import math

import jax
import jax.numpy as jnp
from jax.experimental import pallas as pl
from jax.experimental.pallas import tpu as pltpu


def _round_up(x, m):
    return ((x + m - 1) // m) * m


def _largest_tile(padded_dim, cap):
    """Largest multiple of 128 that divides `padded_dim` (itself a 128-multiple) and is <= cap."""
    best = 128
    t = 128
    while t <= min(cap, padded_dim):
        if padded_dim % t == 0:
            best = t
        t += 128
    return best


def _device_kind():
    try:
        return jax.devices()[0].device_kind.lower()
    except Exception:
        return ""


# ----------------------------------------------------------------------------
# Un-gridded kernel: whole problem resident in VMEM, one MXU push + bias add.
#   x: (B, Dp), w: (Dp, Cp) (pre-transposed, pre-padded), b: (1, Cp)
# ----------------------------------------------------------------------------
def _linear_small_kernel(x_ref, w_ref, b_ref, o_ref):
    acc = jnp.dot(x_ref[...].astype(w_ref.dtype), w_ref[...],
                  preferred_element_type=jnp.float32)
    o_ref[...] = (acc + b_ref[...].astype(jnp.float32)).astype(o_ref.dtype)


# ----------------------------------------------------------------------------
# Tiled kernel: grid = (M, N, K), K innermost. Bias folded into acc init at k==0.
# ----------------------------------------------------------------------------
def _linear_tiled_kernel(x_ref, w_ref, b_ref, o_ref, acc_ref):
    k = pl.program_id(2)

    @pl.when(k == 0)
    def _():
        acc_ref[...] = jnp.broadcast_to(
            b_ref[...].astype(jnp.float32), acc_ref.shape)

    acc_ref[...] += jnp.dot(x_ref[...].astype(w_ref.dtype), w_ref[...],
                            preferred_element_type=jnp.float32)

    @pl.when(k == pl.num_programs(2) - 1)
    def _():
        o_ref[...] = acc_ref[...].astype(o_ref.dtype)


@functools.partial(jax.jit, static_argnames=("class_num",))
def _forward_small(x, w_pad, b_pad, *, class_num):
    B, D = x.shape
    Dp, Cp = w_pad.shape
    if D != Dp:  # only pads when the feature dim is not already 128-dense
        x = jnp.pad(x, ((0, 0), (0, Dp - D)))
    yp = pl.pallas_call(
        _linear_small_kernel,
        out_shape=jax.ShapeDtypeStruct((B, Cp), x.dtype),
    )(x, w_pad, b_pad)
    return yp[:, :class_num] if class_num != Cp else yp


@functools.partial(jax.jit, static_argnames=("class_num", "tm", "tn", "tk"))
def _forward_tiled(x, w_pad, b_pad, *, class_num, tm, tn, tk):
    B, D = x.shape
    Dp, Cp = w_pad.shape
    Bp = _round_up(B, tm)
    if (Bp, Dp) != (B, D):
        x = jnp.pad(x, ((0, Bp - B), (0, Dp - D)))

    yp = pl.pallas_call(
        _linear_tiled_kernel,
        out_shape=jax.ShapeDtypeStruct((Bp, Cp), x.dtype),
        grid_spec=pltpu.PrefetchScalarGridSpec(
            num_scalar_prefetch=0,
            grid=(Bp // tm, Cp // tn, Dp // tk),
            in_specs=[
                pl.BlockSpec((tm, tk), lambda i, j, k: (i, k)),   # x tile
                pl.BlockSpec((tk, tn), lambda i, j, k: (k, j)),   # weight tile, (D, C) layout
                pl.BlockSpec((1, tn), lambda i, j, k: (0, j)),    # bias tile
            ],
            out_specs=pl.BlockSpec((tm, tn), lambda i, j, k: (i, j)),
            scratch_shapes=[pltpu.VMEM((tm, tn), jnp.float32)],
        ),
        compiler_params=pltpu.CompilerParams(
            dimension_semantics=("parallel", "parallel", "arbitrary"),
            vmem_limit_bytes=32 << 20,   # 2*(x+w+out)+acc at 512^3 f32 ~= 7 MiB -> ample headroom
        ),
    )(x, w_pad, b_pad)

    if (Bp, Cp) != (B, class_num):
        yp = yp[:B, :class_num]
    return yp


class FeatClassifier1:
    """Pallas-TPU port of `feat_classifier1` (type='linear'): y = x @ fc.weight.T + fc.bias."""

    _SMALL_PATH_BYTES = 8 << 20   # safe on every generation's default scoped VMEM

    def __init__(self, weight, bias, *, compute_dtype=None):
        weight = jnp.asarray(weight)   # (C, D) torch layout
        bias = jnp.asarray(bias)       # (C,)
        C, D = weight.shape
        assert bias.shape == (C,)
        self.class_num = int(C)
        self.in_dim = int(D)

        kind = _device_kind()
        self._is_v5e = ("v5 lite" in kind) or ("v5e" in kind) or ("v5litepod" in kind)
        self._is_v7 = ("v7" in kind) or ("7x" in kind)

        # Generation-aware tile caps (v5e: 4x128x128 MXU, 16 MiB default scoped VMEM).
        self._tm_cap = 256 if self._is_v5e else 512
        self._tn_cap = 256 if self._is_v5e else 512
        self._tk_cap = 512

        # Minimal lane-dense padding; tiles chosen to divide the padded dims exactly.
        Dp = _round_up(D, 128)
        Cp = _round_up(C, 128)
        self._tk = _largest_tile(Dp, self._tk_cap)
        self._tn = _largest_tile(Cp, self._tn_cap)

        # One-time layout work (outside the per-call hot path): transpose to (D, C) so the
        # kernels use the plain (M,K)x(K,N) contraction, then zero-pad and (optionally) cast.
        w_t = weight.T
        if compute_dtype is not None:
            # TODO(synk): bf16 weight storage halves HBM traffic on v6e/v7x (f32 accumulation
            # kept via preferred_element_type) but loosens numerics; left off by default.
            w_t = w_t.astype(compute_dtype)
        self.w_pad = jnp.pad(w_t, ((0, Dp - D), (0, Cp - C)))
        self.b_pad = jnp.pad(bias, (0, Cp - C)).reshape(1, Cp)

    def __call__(self, x):
        B, D = x.shape
        assert D == self.in_dim, "feature dims must match"
        Dp, Cp = self.w_pad.shape

        itemsize = max(jnp.dtype(x.dtype).itemsize, jnp.dtype(self.w_pad.dtype).itemsize)
        Bp_est = max(B, 8)
        small_bytes = itemsize * (Bp_est * Dp + Dp * Cp + Bp_est * Cp + Cp)
        if small_bytes <= self._SMALL_PATH_BYTES:
            return _forward_small(x, self.w_pad, self.b_pad, class_num=self.class_num)

        # ---- tiled path for large B / C / D ----
        tm = min(self._tm_cap, _round_up(B, 8))
        tn = self._tn
        # v7x: keep >=2 'parallel' tiles so both TensorCores get work.
        if self._is_v7 and (_round_up(B, tm) // tm) == 1 and (Cp // tn) == 1 and Cp >= 256:
            tn = _largest_tile(Cp, Cp // 2)
        return _forward_tiled(x, self.w_pad, self.b_pad,
                              class_num=self.class_num, tm=tm, tn=tn, tk=self._tk)

    forward = __call__


def init_linear_params(key, in_features, out_features, dtype=jnp.float32):
    """Deterministic init matching torch.nn.Linear's default uniform bounds."""
    k_w, k_b = jax.random.split(key)
    bound = 1.0 / math.sqrt(in_features)
    weight = jax.random.uniform(
        k_w, (out_features, in_features), dtype=dtype, minval=-bound, maxval=bound)
    bias = jax.random.uniform(
        k_b, (out_features,), dtype=dtype, minval=-bound, maxval=bound)
    return weight, bias


if __name__ == "__main__":
    key = jax.random.PRNGKey(0)
    k_x, k_fc, k_x2, k_fc2 = jax.random.split(key, 4)

    # --- default module shapes: (4, 256) @ (256 -> 10)  -> single-block path ---
    batch, bottleneck_dim, class_num = 4, 256, 10
    x = jax.random.normal(k_x, (batch, bottleneck_dim), dtype=jnp.float32)
    weight, bias = init_linear_params(k_fc, bottleneck_dim, class_num)

    clf = FeatClassifier1(weight, bias)          # layout work done once here
    y = jax.block_until_ready(clf(x))
    y_ref = x @ weight.T + bias
    assert y.shape == (batch, class_num)
    assert jnp.allclose(y, y_ref, atol=1e-4, rtol=1e-4)

    # --- larger shapes exercise the tiled (M, N, K) path ------------------------
    B2, D2, C2 = 256, 1024, 2048
    x2 = jax.random.normal(k_x2, (B2, D2), dtype=jnp.float32)
    w2, b2 = init_linear_params(k_fc2, D2, C2)

    clf2 = FeatClassifier1(w2, b2)
    y2 = jax.block_until_ready(clf2(x2))
    y2_ref = x2 @ w2.T + b2
    assert y2.shape == (B2, C2)
    assert jnp.allclose(y2, y2_ref, atol=1e-3, rtol=1e-3)

    print("KERNEL_OK")
</pallas_src>

<mosaic_0001>
module attributes {stable_mosaic.version = 11 : i64} {
  func.func @_linear_small_kernel(%arg0: memref<4x256xf32, #tpu.memory_space<vmem>>, %arg1: memref<256x128xf32, #tpu.memory_space<vmem>>, %arg2: memref<1x128xf32, #tpu.memory_space<vmem>>, %arg3: memref<4x128xf32, #tpu.memory_space<vmem>>) attributes {dimension_semantics = [], scalar_prefetch = 0 : i64, scratch_operands = 0 : i64, tpu.core_type = #tpu.core_type<tc>} {
    %c0 = arith.constant 0 : index
    %c0_0 = arith.constant 0 : index
    %0 = vector.load %arg0[%c0, %c0_0] : memref<4x256xf32, #tpu.memory_space<vmem>>, vector<4x256xf32>
    %c0_1 = arith.constant 0 : index
    %c0_2 = arith.constant 0 : index
    %1 = vector.load %arg1[%c0_1, %c0_2] : memref<256x128xf32, #tpu.memory_space<vmem>>, vector<256x128xf32>
    %cst = arith.constant dense<0.000000e+00> : vector<4x128xf32>
    %2 = tpu.matmul %0, %1, %cst {dimension_numbers = #tpu.dot_dimension_numbers<[1], [0], [0], [1], [0, 0, 1, 1], [], []>} : vector<4x256xf32>, vector<256x128xf32>, vector<4x128xf32> -> vector<4x128xf32>
    %c0_3 = arith.constant 0 : index
    %c0_4 = arith.constant 0 : index
    %3 = vector.load %arg2[%c0_3, %c0_4] : memref<1x128xf32, #tpu.memory_space<vmem>>, vector<1x128xf32>
    %4 = vector.broadcast %3 : vector<1x128xf32> to vector<4x128xf32>
    %5 = arith.addf %2, %4 : vector<4x128xf32>
    %c0_5 = arith.constant 0 : index
    %c0_6 = arith.constant 0 : index
    %6 = vector.load %arg3[%c0_5, %c0_6] : memref<4x128xf32, #tpu.memory_space<vmem>>, vector<4x128xf32>
    tpu.vector_store %arg3[%c0_5, %c0_6], %5 {strides = array<i32>} : memref<4x128xf32, #tpu.memory_space<vmem>>, vector<4x128xf32>,
    return
  }
}

</mosaic_0001>

<llo_original>
// kernel: _forward_small.1
$region0: #{_forward_small.1}
  #allocation0 [shape = 'u32[]', space=smem, size = 0x4, offset = 0x4, fixed_abs, tag = 'smem constant byte address 0x4 - core index']
  #allocation1 [shape = 'u32[144,128]{1,0:T(1,128)}', space=vmem, size = 0x12000, scoped, tag = 'internal scratch']
  %s0 = inlined_call_operand.hbm [shape: f32[4,256], index: 0, kind: input, shape index: {}]
  %s1 = inlined_call_operand.hbm [shape: f32[256,128], index: 1, kind: input, shape index: {}]
  %s2 = inlined_call_operand.vmem [shape: f32[1,128], index: 2, kind: input, shape index: {}]
  %s3 = inlined_call_operand.hbm [shape: f32[4,128], index: 3, kind: output, shape index: {}]
  %s4 = sld [smem:[#allocation0]]
  $region30: #{_forward_small.1} parent=0
    _
  %s6 = ssub.s32 1, %s4
  %s7 = scalar_select 0, %s6, %s4
  $region1: #{_forward_small.1} parent=0
    #allocation2 [shape = 'u8[4096]{0}', space=vmem, size = 0x1000, scoped, tag = 'input window, operand 0, single buffered']
    #allocation3 [shape = 's32[1]{0}', space=sflag, size = 0x4, scoped, tag = 'scoped memory for _forward_small.1']
    #allocation4 [shape = 's32[1]{0}', space=sflag, size = 0x4, scoped, tag = 'scoped memory for _forward_small.1']
    #allocation5 [shape = 'u8[131072]{0}', space=vmem, size = 0x20000, scoped, tag = 'input window, operand 1, single buffered']
    #allocation6 [shape = 's32[1]{0}', space=sflag, size = 0x4, scoped, tag = 'scoped memory for _forward_small.1']
    #allocation7 [shape = 'u8[2048]{0}', space=vmem, size = 0x800, scoped, tag = 'output window, operand 0, single buffered']
    %8 = vsyncpa [#allocation3], 0
    %9 = vsyncpa [#allocation6], 0
    %10 = vsyncpa [#allocation4], 0
    // Predicated region
    $region2: #{_forward_small.1} parent=1 // pred_check
      _
    $region3: #{_forward_small.1} parent=1 // pred_check_branch
      %12 = sbr.rel (0) target = $region5
    $region4: #{_forward_small.1} parent=1 // pred_region
      %s14 = ssub.s32 128, 128
      %15 = vsyncadd [#allocation3], %s14
      %s17 = sshll.u32 [#allocation2], 4
      %s18 = int_to_ptr.vmem [resolvable:$true] %s17
      %20 = dma.hbm_to_vmem [thread:$0]  %s0, 128, %s18, [#allocation3]
    $region5: #{_forward_small.1} parent=1 // pred_fallthru
      _
    // Predicated region
    $region6: #{_forward_small.1} parent=1 // pred_check
      _
    $region7: #{_forward_small.1} parent=1 // pred_check_branch
      %22 = sbr.rel (0) target = $region9
    $region8: #{_forward_small.1} parent=1 // pred_region
      %s24 = ssub.s32 4096, 4096
      %25 = vsyncadd [#allocation6], %s24
      %s26 = sshll.u32 [#allocation5], 4
      %s27 = int_to_ptr.vmem [resolvable:$true] %s26
      %32 = dma.hbm_to_vmem [thread:$0]  %s1, 4096, %s27, [#allocation6], 128, 128, 8
    $region9: #{_forward_small.1} parent=1 // pred_fallthru
      _
    // Predicated region
    $region10: #{_forward_small.1} parent=1 // pred_check
      _
    $region11: #{_forward_small.1} parent=1 // pred_check_branch
      %34 = sbr.rel (0) target = $region13
    $region12: #{_forward_small.1} parent=1 // pred_region
      _
    $region13: #{_forward_small.1} parent=1 // pred_fallthru
      _
    // Predicated region
    $region14: #{_forward_small.1} parent=1 // pred_check
      _
    $region15: #{_forward_small.1} parent=1 // pred_check_branch
      %36 = sbr.rel (0) target = $region17
    $region16: #{_forward_small.1} parent=1 // pred_region
      %37 = dma.done [#allocation3], 128
    $region17: #{_forward_small.1} parent=1 // pred_fallthru
      _
    // Predicated region
    $region18: #{_forward_small.1} parent=1 // pred_check
      _
    $region19: #{_forward_small.1} parent=1 // pred_check_branch
      %39 = sbr.rel (0) target = $region21
    $region20: #{_forward_small.1} parent=1 // pred_region
      %40 = dma.done [#allocation6], 4096
    $region21: #{_forward_small.1} parent=1 // pred_fallthru
      _
    %v41 = vld [vmem:[#allocation2] sm:$0xff]
    %v42 = vld [vmem:[#allocation5] sm:$0xff]
    %v43 = vld [vmem:[#allocation5 + $0x8] sm:$0xff]
    %v44 = vld [vmem:[#allocation5 + $0x10] sm:$0xff]
    %v45 = vld [vmem:[#allocation5 + $0x18] sm:$0xff]
    %v46 = vld [vmem:[#allocation5 + $0x20] sm:$0xff]
    %v47 = vld [vmem:[#allocation5 + $0x28] sm:$0xff]
    %v48 = vld [vmem:[#allocation5 + $0x30] sm:$0xff]
    %v49 = vld [vmem:[#allocation5 + $0x38] sm:$0xff]
    %v50 = vld [vmem:[#allocation5 + $0x40] sm:$0xff]
    %v51 = vld [vmem:[#allocation5 + $0x48] sm:$0xff]
    %v52 = vld [vmem:[#allocation5 + $0x50] sm:$0xff]
    %v53 = vld [vmem:[#allocation5 + $0x58] sm:$0xff]
    %v54 = vld [vmem:[#allocation5 + $0x60] sm:$0xff]
    %v55 = vld [vmem:[#allocation5 + $0x68] sm:$0xff]
    %v56 = vld [vmem:[#allocation5 + $0x70] sm:$0xff]
    %v57 = vld [vmem:[#allocation5 + $0x78] sm:$0xff]
    %v58 = vld [vmem:[#allocation5 + $0x80] sm:$0xff]
    %v59 = vld [vmem:[#allocation5 + $0x88] sm:$0xff]
    %v60 = vld [vmem:[#allocation5 + $0x90] sm:$0xff]
    %v61 = vld [vmem:[#allocation5 + $0x98] sm:$0xff]
    %v62 = vld [vmem:[#allocation5 + $0xa0] sm:$0xff]
    %v63 = vld [vmem:[#allocation5 + $0xa8] sm:$0xff]
    %v64 = vld [vmem:[#allocation5 + $0xb0] sm:$0xff]
    %v65 = vld [vmem:[#allocation5 + $0xb8] sm:$0xff]
    %v66 = vld [vmem:[#allocation5 + $0xc0] sm:$0xff]
    %v67 = vld [vmem:[#allocation5 + $0xc8] sm:$0xff]
    %v68 = vld [vmem:[#allocation5 + $0xd0] sm:$0xff]
    %v69 = vld [vmem:[#allocation5 + $0xd8] sm:$0xff]
    %v70 = vld [vmem:[#allocation5 + $0xe0] sm:$0xff]
    %v71 = vld [vmem:[#allocation5 + $0xe8] sm:$0xff]
    %v72 = vld [vmem:[#allocation5 + $0xf0] sm:$0xff]
    %v73 = vld [vmem:[#allocation5 + $0xf8] sm:$0xff]
    %v74 = vld [vmem:[%s2] sm:$0x1]
    %v76 = vlaneseq
    %v77 = vshrl.u32 %v76, 7
    %v78 = vsub.s32 0, %v77
    %v79 = vrot.slane %v74, %v78
    %v82 = vcombine.high %v41, %v41
    %84 = vmatprep.subr.mxu0 0.0
    %85 = vmatpush1.msra.mxu0 %v42
    %86 = vmatprep.subr.mxu0 0.0
    %87 = vmatpush1.msra.mxu0 %v43
    %88 = vmatprep.subr.mxu0 0.0
    %89 = vmatpush1.msra.mxu0 %v44
    %90 = vmatprep.subr.mxu0 0.0
    %91 = vmatpush1.msra.mxu0 %v45
    %92 = vmatprep.subr.mxu0 0.0
    %93 = vmatpush1.msra.mxu0 %v46
    %94 = vmatprep.subr.mxu0 0.0
    %95 = vmatpush1.msra.mxu0 %v47
    %96 = vmatprep.subr.mxu0 0.0
    %97 = vmatpush1.msra.mxu0 %v48
    %98 = vmatprep.subr.mxu0 0.0
    %99 = vmatpush1.msra.mxu0 %v49
    %100 = vmatprep.subr.mxu0 0.0
    %101 = vmatpush1.msra.mxu0 %v50
    %102 = vmatprep.subr.mxu0 0.0
    %103 = vmatpush1.msra.mxu0 %v51
    %104 = vmatprep.subr.mxu0 0.0
    %105 = vmatpush1.msra.mxu0 %v52
    %106 = vmatprep.subr.mxu0 0.0
    %107 = vmatpush1.msra.mxu0 %v53
    %108 = vmatprep.subr.mxu0 0.0
    %109 = vmatpush1.msra.mxu0 %v54
    %110 = vmatprep.subr.mxu0 0.0
    %111 = vmatpush1.msra.mxu0 %v55
    %112 = vmatprep.subr.mxu0 0.0
    %113 = vmatpush1.msra.mxu0 %v56
    %114 = vmatprep.subr.mxu0 0.0
    %115 = vmatpush1.msra.mxu0 %v57
    %116 = vmatprep.subr.mxu0 0.0
    %117 = vmatpush1.msra.mxu0 %v58
    %118 = vmatprep.subr.mxu0 0.0
    %119 = vmatpush1.msra.mxu0 %v59
    %120 = vmatprep.subr.mxu0 0.0
    %121 = vmatpush1.msra.mxu0 %v60
    %122 = vmatprep.subr.mxu0 0.0
    %123 = vmatpush1.msra.mxu0 %v61
    %124 = vmatprep.subr.mxu0 0.0
    %125 = vmatpush1.msra.mxu0 %v62
    %126 = vmatprep.subr.mxu0 0.0
    %127 = vmatpush1.msra.mxu0 %v63
    %128 = vmatprep.subr.mxu0 0.0
    %129 = vmatpush1.msra.mxu0 %v64
    %130 = vmatprep.subr.mxu0 0.0
    %131 = vmatpush1.msra.mxu0 %v65
    %132 = vmatprep.subr.mxu0 0.0
    %133 = vmatpush1.msra.mxu0 %v66
    %134 = vmatprep.subr.mxu0 0.0
    %135 = vmatpush1.msra.mxu0 %v67
    %136 = vmatprep.subr.mxu0 0.0
    %137 = vmatpush1.msra.mxu0 %v68
    %138 = vmatprep.subr.mxu0 0.0
    %139 = vmatpush1.msra.mxu0 %v69
    %140 = vmatprep.subr.mxu0 0.0
    %141 = vmatpush1.msra.mxu0 %v70
    %142 = vmatprep.subr.mxu0 0.0
    %143 = vmatpush1.msra.mxu0 %v71
    %144 = vmatprep.subr.mxu0 0.0
    %145 = vmatpush1.msra.mxu0 %v72
    %146 = vmatprep.subr.mxu0 0.0
    %147 = vmatpush1.msra.mxu0 %v73
    %148 = vmatprep.mubr.f32.mxu0 %v82
    %149 = vmatmul.mubr.f32.gmra.mrb[0].mxu0 %v41
    %v150 = vpop.f32.mrb[0].mxu0
    %v151 = vadd.f32 %v79, %v150
    %v152 = vpop.f32.mrb[0].mxu0
    %153 = vdwg.mxu0
    %154 = vst [vmem:[#allocation7] sm:$0xf] %v151
    // Predicated region
    $region22: #{_forward_small.1} parent=1 // pred_check
      _
    $region23: #{_forward_small.1} parent=1 // pred_check_branch
      %156 = sbr.rel (0) target = $region25
    $region24: #{_forward_small.1} parent=1 // pred_region
      %s158 = ssub.s32 64, 64
      %159 = vsyncadd [#allocation4], %s158
      %s161 = sshll.u32 [#allocation7], 4
      %s162 = int_to_ptr.vmem [resolvable:$true] %s161
      %164 = dma.vmem_to_hbm [thread:$0]  %s162, 64, %s3, [#allocation4]
    $region25: #{_forward_small.1} parent=1 // pred_fallthru
      _
    // Predicated region
    $region26: #{_forward_small.1} parent=1 // pred_check
      _
    $region27: #{_forward_small.1} parent=1 // pred_check_branch
      %166 = sbr.rel (0) target = $region29
    $region28: #{_forward_small.1} parent=1 // pred_region
      %167 = dma.done [#allocation4], 64
    $region29: #{_forward_small.1} parent=1 // pred_fallthru
      _
    %168 = vsyncpa [#allocation3], 1
    %169 = vsyncpa [#allocation6], 1
    %170 = vsyncpa [#allocation4], 1

</llo_original>
